<compile_context>
chip_gen: v7x
topology: tpu7x:2x2x1
jax: 0.10.0
libtpu: 0.0.40
codegen_flags: <defaults>
</compile_context>

<pallas_src>
import functools
import math

import jax
import jax.numpy as jnp
from jax.experimental import pallas as pl
from jax.experimental.pallas import tpu as pltpu


def _round_up(x, m):
    return ((x + m - 1) // m) * m


# --------------------------------------------------------------------------------------------
# Kernel
# --------------------------------------------------------------------------------------------
def _seq_bow_ved_kernel(
    emb_ref, mask_ref, bow_ref, eps_ref, w_enc_ref, b_enc_ref, w_ext_ref,
    out_ref,
    z_sc, t_sc, s_sc, kl_sc, ent_sc, cls_sc,
    *, kld_wt, entropy_loss_coef, n_latent, num_classes, ke, tv, resident,
):
    f32 = jnp.float32
    bf16 = jnp.bfloat16
    K = n_latent
    C = num_classes
    v = pl.program_id(1)
    nv = pl.num_programs(1)

    # -------------- encoder / latent stats: once per batch tile (first vocab step) -----------
    @pl.when(v == 0)
    def _encode():
        emb = emb_ref[...]                                   # (TB, S, H) bf16
        mask = mask_ref[...]                                 # (TB, S)    bf16 {0,1}

        # masked-sum pooling on the MXU (batched (1,S)@(S,H)); avoids a (TB,S,H) f32 temporary
        summed = jnp.einsum("bqs,bsh->bqh", mask[:, None, :], emb,
                            preferred_element_type=f32)[:, 0, :]          # (TB, H) f32
        denom = jnp.maximum(jnp.sum(mask.astype(f32), axis=1, keepdims=True), 1e-9)
        enc = (summed / denom).astype(bf16)                  # exact divide (matches reference)

        # one fused matmul: [mu | logvar | classifier-folded-through-mu]
        fused = jnp.dot(enc, w_enc_ref[...],
                        preferred_element_type=f32) + b_enc_ref[...]      # (TB, 2K+C) f32
        mu = fused[:, :K]
        lv = fused[:, K:2 * K]
        cls_sc[...] = fused[:, 2 * K:2 * K + C]

        std = jnp.exp(0.5 * lv)
        z_raw = mu + std * eps_ref[...]                      # reparameterized sample

        # KL vs logistic-normal prior (alpha = 1); reuse std*std == exp(lv)
        prior_var = 1.0 - 2.0 / K + 1.0 / (K * K)
        inv_pv = 1.0 / prior_var
        kl = 0.5 * (jnp.sum(std * std * inv_pv + mu * mu * inv_pv
                            + math.log(prior_var) - lv, axis=1, keepdims=True) - float(K))
        kl_sc[...] = kl * kld_wt

        # project the sample onto the simplex (softmax over latents); exact normalization
        z_shift = z_raw - jnp.max(z_raw, axis=1, keepdims=True)
        z_exp = jnp.exp(z_shift)
        z = z_exp / jnp.sum(z_exp, axis=1, keepdims=True)

        # latent sparsity term: Categorical(probs=z).entropy()
        ent_sc[...] = -jnp.sum(z * jnp.log(jnp.maximum(z, 1e-30)), axis=1, keepdims=True)

        tb = z.shape[0]
        # [z | 1 | 0...]: one matmul with w_ext then gives z @ w_dec + (b_dec - M)
        z_sc[...] = jnp.concatenate(
            [z, jnp.ones((tb, 1), f32), jnp.zeros((tb, ke - K - 1), f32)], axis=1)
        t_sc[...] = jnp.zeros_like(t_sc)
        s_sc[...] = jnp.zeros_like(s_sc)

    # -------------- decoder tile: every vocab step --------------------------------------------
    if resident:
        # whole (KE, V_pad) bf16 decoder matrix is VMEM-resident; slice the current tile
        start = pl.multiple_of(v * tv, 128)
        w_tile = w_ext_ref[:, pl.ds(start, tv)]              # (KE, TV) bf16
    else:
        w_tile = w_ext_ref[...]                              # (KE, TV) bf16

    z1 = z_sc[...].astype(bf16)                              # (TB, KE)
    bow = bow_ref[...]                                       # (TB, TV) bf16

    # dec is pre-shifted by the static bound M (bias row holds b_dec - M) => exp never overflows
    dec = jnp.dot(z1, w_tile, preferred_element_type=f32)    # (TB, TV) f32, <= 0 on real cols
    s_sc[...] += jnp.sum(jnp.exp(dec), axis=1, keepdims=True)

    # all bow-side reductions via the MXU: rows [w_dec | b_dec - M | ones] give
    #   [bow @ w_dec^T | bow.(b_dec - M) | sum(bow)] in one contraction
    t_sc[...] += jax.lax.dot_general(bow, w_tile, (((1,), (1,)), ((), ())),
                                     preferred_element_type=f32)          # (TB, KE)

    # -------------- finalize on last vocab tile: one lane-dense packed output -----------------
    @pl.when(v == nv - 1)
    def _finalize():
        t_acc = t_sc[...]                                    # (TB, KE)
        zf = z_sc[...][:, :K]                                # (TB, K) f32
        # sum_j bow*(dec - M); the M terms cancel against the shifted logsumexp below
        bd = jnp.sum(zf * t_acc[:, :K], axis=1, keepdims=True) + t_acc[:, K:K + 1]
        bsum = t_acc[:, K + 1:K + 2]
        lse = jnp.log(jnp.maximum(s_sc[...], 1e-35))         # == logsumexp(dec) - M
        rec = bsum * lse - bd                                # == -sum(bow * log softmax(dec))
        kl_loss = kl_sc[...]
        red = ent_sc[...]                                    # redundancy_loss = entropy_loss
        # _get_elbo adds entropy*coef, forward_with_cached_encoding then adds redundancy again
        elbo = rec + kl_loss + red * entropy_loss_coef + red

        out_ref[...] = jnp.zeros_like(out_ref)
        out_ref[:, 0:1] = elbo
        out_ref[:, 1:2] = rec
        out_ref[:, 2:3] = kl_loss
        out_ref[:, 3:4] = red
        out_ref[:, 4:4 + C] = cls_sc[...]


# --------------------------------------------------------------------------------------------
# Tiling / VMEM sizing
# --------------------------------------------------------------------------------------------
def _vmem_budget_and_limit():
    """Generation-aware VMEM budget (v5e/v6e: 128 MiB physical, v7x: 64 MiB)."""
    cap = 64 * 1024 * 1024
    try:
        cap = int(pltpu.get_tpu_info().vmem_capacity_bytes)
    except Exception:
        pass
    limit = max(32 * 1024 * 1024, min(cap - 16 * 1024 * 1024, 100 * 1024 * 1024))
    budget = int(limit * 0.85)
    return budget, limit


def _derive_tiles(B, S, H, V, K, C, budget):
    """TB-first tiling (amortizes the decoder stream / fills MXU rows); TV capped at 2048."""
    KE = _round_up(K + 2, 8)
    F = 2 * K + C
    B8 = _round_up(max(B, 1), 8)

    TV = min(_round_up(V, 128), 2048)
    V_pad = _round_up(V, TV)
    res_bytes = 2 * KE * V_pad * 2                       # bf16, double-buffered
    resident = res_bytes <= max(4 * 1024 * 1024, int(0.35 * budget))

    def need(tb, tv):
        wd = res_bytes if resident else 2 * KE * tv * 2
        inputs = 2 * (tb * S * H * 2 + tb * S * 2 + tb * tv * 2 + tb * K * 4
                      + H * F * 2 + F * 4 + tb * 128 * 4)
        scratch = tb * (KE * 8 + 8 * 128) * 4
        live = 2 * tb * tv * 4 + tb * (H + F) * 4        # dec/exp tile + pooled intermediates
        return inputs + wd + scratch + live

    # shrink TV only if even TB=8 does not fit
    while TV > 128 and need(8, TV) > budget:
        TV = max(128, _round_up(TV // 2, 128))
        V_pad = _round_up(V, TV)
        res_bytes = 2 * KE * V_pad * 2
        resident = res_bytes <= max(4 * 1024 * 1024, int(0.35 * budget))

    # grow TB first, but keep nb >= 2 when the batch allows so both v7x TensorCores get work
    tb_cap = B8 if B8 < 16 else max(8, (B8 // 2) // 8 * 8)
    tb_cap = min(tb_cap, 256)
    TB = 8
    while TB * 2 <= tb_cap and need(TB * 2, TV) <= budget:
        TB *= 2
    return TB, TV, V_pad, KE, resident


# --------------------------------------------------------------------------------------------
# Wrapper
# --------------------------------------------------------------------------------------------
def seq_bow_ved_forward(token_embeddings, attention_mask, bow, eps, params,
                        *, kld_wt=0.1, entropy_loss_coef=1000.0):
    f32, bf16 = jnp.float32, jnp.bfloat16
    B, S, H = token_embeddings.shape
    V = bow.shape[1]
    K = eps.shape[1]
    C = params["w_cls"].shape[1]
    F = 2 * K + C
    OUT_W = max(128, _round_up(4 + C, 128))

    budget, vmem_limit = _vmem_budget_and_limit()
    TB, TV, V_pad, KE, resident = _derive_tiles(B, S, H, V, K, C, budget)
    B_pad = _round_up(_round_up(max(B, 1), 8), TB)

    # fuse tiny matmuls: [w_mu | w_lv | w_mu @ w_cls] (classifier folded; BN/dropout identity)
    w_mu = params["w_mu"].astype(f32)
    b_mu = params["b_mu"].astype(f32)
    w_cls_f = w_mu @ params["w_cls"].astype(f32)
    b_cls_f = b_mu @ params["w_cls"].astype(f32) + params["b_cls"].astype(f32)
    w_enc = jnp.concatenate([w_mu, params["w_lv"].astype(f32), w_cls_f], axis=1).astype(bf16)
    b_enc = jnp.concatenate([b_mu, params["b_lv"].astype(f32), b_cls_f], axis=1).astype(f32)

    # extended decoder matrix with the bias pre-shifted by the static logsumexp bound M
    w_dec = params["w_dec"].astype(f32)                  # (K, V)
    b_dec = params["b_dec"].astype(f32)                  # (1, V)
    M = jnp.max(jnp.max(w_dec, axis=0) + b_dec[0])       # dec <= M since z lies on the simplex
    w_ext = jnp.zeros((KE, V_pad), f32)
    w_ext = w_ext.at[:K, :V].set(w_dec)
    w_ext = w_ext.at[K, :V].set(b_dec[0] - M)
    w_ext = w_ext.at[K, V:].set(-1e30)                   # padded vocab cols vanish from softmax
    w_ext = w_ext.at[K + 1, :V].set(1.0)                 # ones row -> sum(bow) on the MXU
    w_ext = w_ext.astype(bf16)

    # pad & cast inputs (bf16 activations halve the dominant HBM traffic)
    emb = jnp.pad(token_embeddings.astype(bf16), ((0, B_pad - B), (0, 0), (0, 0)))
    mask = jnp.pad(attention_mask.astype(bf16), ((0, B_pad - B), (0, 0)))
    bow_p = jnp.pad(bow.astype(bf16), ((0, B_pad - B), (0, V_pad - V)))
    eps_p = jnp.pad(eps.astype(f32), ((0, B_pad - B), (0, 0)))

    nb, nv = B_pad // TB, V_pad // TV

    if resident:
        w_ext_spec = pl.BlockSpec((KE, V_pad), lambda b, v: (0, 0))   # fetched once, stays put
    else:
        w_ext_spec = pl.BlockSpec((KE, TV), lambda b, v: (0, v))      # streamed per vocab tile

    kernel = functools.partial(
        _seq_bow_ved_kernel,
        kld_wt=float(kld_wt), entropy_loss_coef=float(entropy_loss_coef),
        n_latent=int(K), num_classes=int(C), ke=int(KE), tv=int(TV),
        resident=bool(resident))

    grid_spec = pltpu.PrefetchScalarGridSpec(
        num_scalar_prefetch=0,
        grid=(nb, nv),
        in_specs=[
            pl.BlockSpec((TB, S, H), lambda b, v: (b, 0, 0)),   # emb
            pl.BlockSpec((TB, S),    lambda b, v: (b, 0)),      # mask
            pl.BlockSpec((TB, TV),   lambda b, v: (b, v)),      # bow
            pl.BlockSpec((TB, K),    lambda b, v: (b, 0)),      # eps
            pl.BlockSpec((H, F),     lambda b, v: (0, 0)),      # fused encoder weight (resident)
            pl.BlockSpec((1, F),     lambda b, v: (0, 0)),      # fused encoder bias
            w_ext_spec,                                         # extended decoder matrix
        ],
        out_specs=pl.BlockSpec((TB, OUT_W), lambda b, v: (b, 0)),
        scratch_shapes=[
            pltpu.VMEM((TB, KE), jnp.float32),  # [z | 1 | 0...] extended simplex sample
            pltpu.VMEM((TB, KE), jnp.float32),  # accumulated bow @ w_ext^T
            pltpu.VMEM((TB, 1), jnp.float32),   # accumulated sum(exp(dec - M))
            pltpu.VMEM((TB, 1), jnp.float32),   # KL * kld_wt
            pltpu.VMEM((TB, 1), jnp.float32),   # entropy of z
            pltpu.VMEM((TB, C), jnp.float32),   # classifier logits
        ],
    )

    out = pl.pallas_call(
        kernel,
        out_shape=jax.ShapeDtypeStruct((B_pad, OUT_W), jnp.float32),
        grid_spec=grid_spec,
        compiler_params=pltpu.CompilerParams(
            dimension_semantics=("parallel", "arbitrary"),
            vmem_limit_bytes=int(vmem_limit)),
    )(emb, mask, bow_p, eps_p, w_enc, b_enc, w_ext)

    elbo = out[:B, 0]
    rec = out[:B, 1]
    kl = out[:B, 2]
    red = out[:B, 3]
    cls_out = out[:B, 4:4 + C]
    return elbo, rec, kl, red, cls_out


def _xavier_uniform(key, fan_in, fan_out):
    bound = math.sqrt(6.0 / (fan_in + fan_out))
    return jax.random.uniform(key, (fan_in, fan_out), jnp.float32, -bound, bound)


if __name__ == "__main__":
    # Small shapes consistent with the module's forward.
    B, S, H = 2, 8, 32       # batch, seq len, LLM hidden size (enc_size)
    K = 16                   # n_latent
    V = 256                  # bow vocab_size
    C = 4                    # num_classes (has_classifier = True)
    LLM_VOCAB = 100

    root = jax.random.PRNGKey(0)
    (k_ids, k_emb, k_bow, k_eps,
     k_wmu, k_wlv, k_wdec, k_bdec, k_wcls, k_bcls, k_len) = jax.random.split(root, 11)

    # Synthetic LLM: embedding lookup producing last_hidden_state (plain-JAX glue).
    llm_table = jax.random.normal(k_emb, (LLM_VOCAB, H), jnp.float32) * 0.1
    input_ids = jax.random.randint(k_ids, (B, S), 0, LLM_VOCAB)
    token_embeddings = llm_table[input_ids]                                  # (B, S, H)

    lengths = jax.random.randint(k_len, (B, 1), S // 2, S + 1)
    attention_mask = (jnp.arange(S)[None, :] < lengths).astype(jnp.float32)  # (B, S)

    bow = jax.random.randint(k_bow, (B, V), 0, 5).astype(jnp.float32)        # dense BoW
    eps = jax.random.normal(k_eps, (B, K), jnp.float32)                      # reparam noise

    params = {
        "w_mu": _xavier_uniform(k_wmu, H, K),
        "b_mu": jnp.zeros((1, K), jnp.float32),
        "w_lv": _xavier_uniform(k_wlv, H, K),
        "b_lv": jnp.zeros((1, K), jnp.float32),
        "w_dec": _xavier_uniform(k_wdec, K, V),
        "b_dec": jax.random.uniform(k_bdec, (1, V), jnp.float32,
                                    -1.0 / math.sqrt(K), 1.0 / math.sqrt(K)),
        "w_cls": _xavier_uniform(k_wcls, K, C),
        "b_cls": jax.random.uniform(k_bcls, (1, C), jnp.float32,
                                    -1.0 / math.sqrt(K), 1.0 / math.sqrt(K)),
    }

    outs = seq_bow_ved_forward(token_embeddings, attention_mask, bow, eps, params,
                               kld_wt=0.1, entropy_loss_coef=1000.0)
    outs = jax.block_until_ready(outs)
    elbo, rec_loss, kl_loss, redundancy_loss, classifier_outputs = outs

    assert elbo.shape == (B,) and rec_loss.shape == (B,)
    assert kl_loss.shape == (B,) and redundancy_loss.shape == (B,)
    assert classifier_outputs.shape == (B, C)
    assert all(bool(jnp.all(jnp.isfinite(o))) for o in outs)
    print("KERNEL_OK")
</pallas_src>

<mosaic_0001>
module attributes {stable_mosaic.version = 11 : i64} {
  func.func @_seq_bow_ved_kernel(%arg0: i32, %arg1: i32, %arg2: memref<8x8x32xbf16, #tpu.memory_space<vmem>>, %arg3: memref<8x8xbf16, #tpu.memory_space<vmem>>, %arg4: memref<8x256xbf16, #tpu.memory_space<vmem>>, %arg5: memref<8x16xf32, #tpu.memory_space<vmem>>, %arg6: memref<32x36xbf16, #tpu.memory_space<vmem>>, %arg7: memref<1x36xf32, #tpu.memory_space<vmem>>, %arg8: memref<24x256xbf16, #tpu.memory_space<vmem>>, %arg9: memref<8x128xf32, #tpu.memory_space<vmem>>, %arg10: memref<8x24xf32, #tpu.memory_space<vmem>>, %arg11: memref<8x24xf32, #tpu.memory_space<vmem>>, %arg12: memref<8x1xf32, #tpu.memory_space<vmem>>, %arg13: memref<8x1xf32, #tpu.memory_space<vmem>>, %arg14: memref<8x1xf32, #tpu.memory_space<vmem>>, %arg15: memref<8x4xf32, #tpu.memory_space<vmem>>) attributes {dimension_semantics = [#tpu.dimension_semantics<parallel>, #tpu.dimension_semantics<arbitrary>], iteration_bounds = array<i64: 1, 1>, scalar_prefetch = 0 : i64, scratch_operands = 6 : i64, tpu.core_type = #tpu.core_type<tc>, window_params = [{transform_indices = @transform_0, window_bounds = array<i64: 8, 8, 32>}, {transform_indices = @transform_1, window_bounds = array<i64: 8, 8>}, {transform_indices = @transform_2, window_bounds = array<i64: 8, 256>}, {transform_indices = @transform_3, window_bounds = array<i64: 8, 16>}, {pipeline_mode = #tpu.pipeline_mode<synchronous>, transform_indices = @transform_4, window_bounds = array<i64: 32, 36>}, {pipeline_mode = #tpu.pipeline_mode<synchronous>, transform_indices = @transform_5, window_bounds = array<i64: 1, 36>}, {pipeline_mode = #tpu.pipeline_mode<synchronous>, transform_indices = @transform_6, window_bounds = array<i64: 24, 256>}, {transform_indices = @transform_7, window_bounds = array<i64: 8, 128>}]} {
    %c0_i32 = arith.constant 0 : i32
    %0 = arith.cmpi eq, %arg1, %c0_i32 : i32
    %1 = arith.extui %0 : i1 to i32
    %c0_i32_0 = arith.constant 0 : i32
    %2 = arith.cmpi ne, %1, %c0_i32_0 : i32
    scf.if %2 {
      %c0_17 = arith.constant 0 : index
      %c0_18 = arith.constant 0 : index
      %c0_19 = arith.constant 0 : index
      %24 = vector.load %arg2[%c0_17, %c0_18, %c0_19] : memref<8x8x32xbf16, #tpu.memory_space<vmem>>, vector<8x8x32xbf16>
      %c0_20 = arith.constant 0 : index
      %c0_21 = arith.constant 0 : index
      %25 = vector.load %arg3[%c0_20, %c0_21] : memref<8x8xbf16, #tpu.memory_space<vmem>>, vector<8x8xbf16>
      %26 = vector.shape_cast %25 : vector<8x8xbf16> to vector<8x1x8xbf16>
      "tpu.trace_start"() <{level = 10 : i32, message = "bqs,bsh->bqh"}> : () -> ()
      %cst_22 = arith.constant dense<0.000000e+00> : vector<8x1x32xf32>
      %27 = tpu.matmul %26, %24, %cst_22 {dimension_numbers = #tpu.dot_dimension_numbers<[2], [1], [1], [2], [0, 0, 0, 1, 1, 2], [0], [0]>} : vector<8x1x8xbf16>, vector<8x8x32xbf16>, vector<8x1x32xf32> -> vector<8x1x32xf32>
      "tpu.trace_stop"() : () -> ()
      %28 = vector.shape_cast %27 : vector<8x1x32xf32> to vector<8x32xf32>
      %29 = arith.extf %25 : vector<8x8xbf16> to vector<8x8xf32>
      %cst_23 = arith.constant dense<0.000000e+00> : vector<8xf32>
      %30 = vector.multi_reduction <add>, %29, %cst_23 [1] : vector<8x8xf32> to vector<8xf32>
      %31 = vector.shape_cast %30 : vector<8xf32> to vector<8x1xf32>
      %cst_24 = arith.constant 9.99999971E-10 : f32
      %32 = vector.broadcast %cst_24 : f32 to vector<8x1xf32>
      %33 = arith.maximumf %31, %32 : vector<8x1xf32>
      %34 = vector.broadcast %33 : vector<8x1xf32> to vector<8x32xf32>
      %35 = arith.divf %28, %34 : vector<8x32xf32>
      %36 = arith.truncf %35 : vector<8x32xf32> to vector<8x32xbf16>
      %c0_25 = arith.constant 0 : index
      %c0_26 = arith.constant 0 : index
      %37 = vector.load %arg6[%c0_25, %c0_26] : memref<32x36xbf16, #tpu.memory_space<vmem>>, vector<32x36xbf16>
      %cst_27 = arith.constant dense<0.000000e+00> : vector<8x36xf32>
      %38 = tpu.matmul %36, %37, %cst_27 {dimension_numbers = #tpu.dot_dimension_numbers<[1], [0], [0], [1], [0, 0, 1, 1], [], []>} : vector<8x32xbf16>, vector<32x36xbf16>, vector<8x36xf32> -> vector<8x36xf32>
      %c0_28 = arith.constant 0 : index
      %c0_29 = arith.constant 0 : index
      %39 = vector.load %arg7[%c0_28, %c0_29] : memref<1x36xf32, #tpu.memory_space<vmem>>, vector<1x36xf32>
      %40 = vector.broadcast %39 : vector<1x36xf32> to vector<8x36xf32>
      %41 = arith.addf %38, %40 : vector<8x36xf32>
      %42 = vector.extract_strided_slice %41 {offsets = [0, 0], sizes = [8, 16], strides = [1, 1]} : vector<8x36xf32> to vector<8x16xf32>
      %43 = vector.extract_strided_slice %41 {offsets = [0, 16], sizes = [8, 16], strides = [1, 1]} : vector<8x36xf32> to vector<8x16xf32>
      %44 = vector.extract_strided_slice %41 {offsets = [0, 32], sizes = [8, 4], strides = [1, 1]} : vector<8x36xf32> to vector<8x4xf32>
      %c0_30 = arith.constant 0 : index
      %c0_31 = arith.constant 0 : index
      %45 = vector.load %arg15[%c0_30, %c0_31] : memref<8x4xf32, #tpu.memory_space<vmem>>, vector<8x4xf32>
      tpu.vector_store %arg15[%c0_30, %c0_31], %44 {strides = array<i32>} : memref<8x4xf32, #tpu.memory_space<vmem>>, vector<8x4xf32>,
      %cst_32 = arith.constant 5.000000e-01 : f32
      %46 = vector.broadcast %cst_32 : f32 to vector<8x16xf32>
      %47 = arith.mulf %46, %43 : vector<8x16xf32>
      %48 = math.exp %47 : vector<8x16xf32>
      %c0_33 = arith.constant 0 : index
      %c0_34 = arith.constant 0 : index
      %49 = vector.load %arg5[%c0_33, %c0_34] : memref<8x16xf32, #tpu.memory_space<vmem>>, vector<8x16xf32>
      %50 = arith.mulf %48, %49 : vector<8x16xf32>
      %51 = arith.addf %42, %50 : vector<8x16xf32>
      %52 = arith.mulf %48, %48 : vector<8x16xf32>
      %cst_35 = arith.constant 1.13777781 : f32
      %53 = vector.broadcast %cst_35 : f32 to vector<8x16xf32>
      %54 = arith.mulf %52, %53 : vector<8x16xf32>
      %55 = arith.mulf %42, %42 : vector<8x16xf32>
      %cst_36 = arith.constant 1.13777781 : f32
      %56 = vector.broadcast %cst_36 : f32 to vector<8x16xf32>
      %57 = arith.mulf %55, %56 : vector<8x16xf32>
      %58 = arith.addf %54, %57 : vector<8x16xf32>
      %cst_37 = arith.constant -0.129077047 : f32
      %59 = vector.broadcast %cst_37 : f32 to vector<8x16xf32>
      %60 = arith.addf %58, %59 : vector<8x16xf32>
      %61 = arith.subf %60, %43 : vector<8x16xf32>
      %cst_38 = arith.constant dense<0.000000e+00> : vector<8xf32>
      %62 = vector.multi_reduction <add>, %61, %cst_38 [1] : vector<8x16xf32> to vector<8xf32>
      %63 = vector.shape_cast %62 : vector<8xf32> to vector<8x1xf32>
      %cst_39 = arith.constant 1.600000e+01 : f32
      %64 = vector.broadcast %cst_39 : f32 to vector<8x1xf32>
      %65 = arith.subf %63, %64 : vector<8x1xf32>
      %cst_40 = arith.constant 5.000000e-01 : f32
      %66 = vector.broadcast %cst_40 : f32 to vector<8x1xf32>
      %67 = arith.mulf %66, %65 : vector<8x1xf32>
      %cst_41 = arith.constant 1.000000e-01 : f32
      %68 = vector.broadcast %cst_41 : f32 to vector<8x1xf32>
      %69 = arith.mulf %67, %68 : vector<8x1xf32>
      %c0_42 = arith.constant 0 : index
      %c0_43 = arith.constant 0 : index
      %70 = vector.load %arg13[%c0_42, %c0_43] : memref<8x1xf32, #tpu.memory_space<vmem>>, vector<8x1xf32>
      tpu.vector_store %arg13[%c0_42, %c0_43], %69 {strides = array<i32>} : memref<8x1xf32, #tpu.memory_space<vmem>>, vector<8x1xf32>,
      %cst_44 = arith.constant dense<0xFF800000> : vector<8xf32>
      %71 = vector.multi_reduction <maximumf>, %51, %cst_44 [1] : vector<8x16xf32> to vector<8xf32>
      %72 = vector.shape_cast %71 : vector<8xf32> to vector<8x1xf32>
      %73 = vector.broadcast %72 : vector<8x1xf32> to vector<8x16xf32>
      %74 = arith.subf %51, %73 : vector<8x16xf32>
      %75 = math.exp %74 : vector<8x16xf32>
      %cst_45 = arith.constant dense<0.000000e+00> : vector<8xf32>
      %76 = vector.multi_reduction <add>, %75, %cst_45 [1] : vector<8x16xf32> to vector<8xf32>
      %77 = vector.shape_cast %76 : vector<8xf32> to vector<8x1xf32>
      %78 = vector.broadcast %77 : vector<8x1xf32> to vector<8x16xf32>
      %79 = arith.divf %75, %78 : vector<8x16xf32>
      %cst_46 = arith.constant 1.000000e-30 : f32
      %80 = vector.broadcast %cst_46 : f32 to vector<8x16xf32>
      %81 = arith.maximumf %79, %80 : vector<8x16xf32>
      %82 = math.log %81 : vector<8x16xf32>
      %83 = arith.mulf %79, %82 : vector<8x16xf32>
      %cst_47 = arith.constant dense<0.000000e+00> : vector<8xf32>
      %84 = vector.multi_reduction <add>, %83, %cst_47 [1] : vector<8x16xf32> to vector<8xf32>
      %85 = vector.shape_cast %84 : vector<8xf32> to vector<8x1xf32>
      %cst_48 = arith.constant 0.000000e+00 : f32
      %86 = vector.broadcast %cst_48 : f32 to vector<8x1xf32>
      %87 = arith.subf %86, %85 : vector<8x1xf32>
      %c0_49 = arith.constant 0 : index
      %c0_50 = arith.constant 0 : index
      %88 = vector.load %arg14[%c0_49, %c0_50] : memref<8x1xf32, #tpu.memory_space<vmem>>, vector<8x1xf32>
      tpu.vector_store %arg14[%c0_49, %c0_50], %87 {strides = array<i32>} : memref<8x1xf32, #tpu.memory_space<vmem>>, vector<8x1xf32>,
      %cst_51 = arith.constant 1.000000e+00 : f32
      %89 = vector.broadcast %cst_51 : f32 to vector<8x1xf32>
      %cst_52 = arith.constant 0.000000e+00 : f32
      %90 = vector.broadcast %cst_52 : f32 to vector<8x7xf32>
      %91 = tpu.concatenate %79, %89, %90 in 1 : vector<8x16xf32>, vector<8x1xf32>, vector<8x7xf32> -> vector<8x24xf32>
      %c0_53 = arith.constant 0 : index
      %c0_54 = arith.constant 0 : index
      %92 = vector.load %arg10[%c0_53, %c0_54] : memref<8x24xf32, #tpu.memory_space<vmem>>, vector<8x24xf32>
      tpu.vector_store %arg10[%c0_53, %c0_54], %91 {strides = array<i32>} : memref<8x24xf32, #tpu.memory_space<vmem>>, vector<8x24xf32>,
      %cst_55 = arith.constant 0.000000e+00 : f32
      %93 = vector.broadcast %cst_55 : f32 to vector<8x24xf32>
      %c0_56 = arith.constant 0 : index
      %c0_57 = arith.constant 0 : index
      %94 = vector.load %arg11[%c0_56, %c0_57] : memref<8x24xf32, #tpu.memory_space<vmem>>, vector<8x24xf32>
      tpu.vector_store %arg11[%c0_56, %c0_57], %93 {strides = array<i32>} : memref<8x24xf32, #tpu.memory_space<vmem>>, vector<8x24xf32>,
      %cst_58 = arith.constant 0.000000e+00 : f32
      %95 = vector.broadcast %cst_58 : f32 to vector<8x1xf32>
      %c0_59 = arith.constant 0 : index
      %c0_60 = arith.constant 0 : index
      %96 = vector.load %arg12[%c0_59, %c0_60] : memref<8x1xf32, #tpu.memory_space<vmem>>, vector<8x1xf32>
      tpu.vector_store %arg12[%c0_59, %c0_60], %95 {strides = array<i32>} : memref<8x1xf32, #tpu.memory_space<vmem>>, vector<8x1xf32>,
    } else {
    }
    %c256_i32 = arith.constant 256 : i32
    %3 = arith.muli %arg1, %c256_i32 : i32
    %4 = tpu.assume_multiple %3, 128 : i32
    %c0 = arith.constant 0 : index
    %5 = arith.index_cast %4 : i32 to index
    %6 = vector.load %arg8[%c0, %5] : memref<24x256xbf16, #tpu.memory_space<vmem>>, vector<24x256xbf16>
    %c0_1 = arith.constant 0 : index
    %c0_2 = arith.constant 0 : index
    %7 = vector.load %arg10[%c0_1, %c0_2] : memref<8x24xf32, #tpu.memory_space<vmem>>, vector<8x24xf32>
    %8 = arith.truncf %7 : vector<8x24xf32> to vector<8x24xbf16>
    %c0_3 = arith.constant 0 : index
    %c0_4 = arith.constant 0 : index
    %9 = vector.load %arg4[%c0_3, %c0_4] : memref<8x256xbf16, #tpu.memory_space<vmem>>, vector<8x256xbf16>
    %cst = arith.constant dense<0.000000e+00> : vector<8x256xf32>
    %10 = tpu.matmul %8, %6, %cst {dimension_numbers = #tpu.dot_dimension_numbers<[1], [0], [0], [1], [0, 0, 1, 1], [], []>} : vector<8x24xbf16>, vector<24x256xbf16>, vector<8x256xf32> -> vector<8x256xf32>
    %c0_5 = arith.constant 0 : index
    %c0_6 = arith.constant 0 : index
    %11 = vector.load %arg12[%c0_5, %c0_6] : memref<8x1xf32, #tpu.memory_space<vmem>>, vector<8x1xf32>
    %12 = math.exp %10 : vector<8x256xf32>
    %cst_7 = arith.constant dense<0.000000e+00> : vector<8xf32>
    %13 = vector.multi_reduction <add>, %12, %cst_7 [1] : vector<8x256xf32> to vector<8xf32>
    %14 = vector.shape_cast %13 : vector<8xf32> to vector<8x1xf32>
    %15 = arith.addf %11, %14 : vector<8x1xf32>
    %c0_8 = arith.constant 0 : index
    %c0_9 = arith.constant 0 : index
    %16 = vector.load %arg12[%c0_8, %c0_9] : memref<8x1xf32, #tpu.memory_space<vmem>>, vector<8x1xf32>
    tpu.vector_store %arg12[%c0_8, %c0_9], %15 {strides = array<i32>} : memref<8x1xf32, #tpu.memory_space<vmem>>, vector<8x1xf32>,
    %c0_10 = arith.constant 0 : index
    %c0_11 = arith.constant 0 : index
    %17 = vector.load %arg11[%c0_10, %c0_11] : memref<8x24xf32, #tpu.memory_space<vmem>>, vector<8x24xf32>
    %cst_12 = arith.constant dense<0.000000e+00> : vector<8x24xf32>
    %18 = tpu.matmul %9, %6, %cst_12 {dimension_numbers = #tpu.dot_dimension_numbers<[1], [1], [0], [0], [0, 0, 1, 0], [], []>} : vector<8x256xbf16>, vector<24x256xbf16>, vector<8x24xf32> -> vector<8x24xf32>
    %19 = arith.addf %17, %18 : vector<8x24xf32>
    %c0_13 = arith.constant 0 : index
    %c0_14 = arith.constant 0 : index
    %20 = vector.load %arg11[%c0_13, %c0_14] : memref<8x24xf32, #tpu.memory_space<vmem>>, vector<8x24xf32>
    tpu.vector_store %arg11[%c0_13, %c0_14], %19 {strides = array<i32>} : memref<8x24xf32, #tpu.memory_space<vmem>>, vector<8x24xf32>,
    %c0_i32_15 = arith.constant 0 : i32
    %21 = arith.cmpi eq, %arg1, %c0_i32_15 : i32
    %22 = arith.extui %21 : i1 to i32
    %c0_i32_16 = arith.constant 0 : i32
    %23 = arith.cmpi ne, %22, %c0_i32_16 : i32
    scf.if %23 {
      %c0_17 = arith.constant 0 : index
      %c0_18 = arith.constant 0 : index
      %24 = vector.load %arg11[%c0_17, %c0_18] : memref<8x24xf32, #tpu.memory_space<vmem>>, vector<8x24xf32>
      %c0_19 = arith.constant 0 : index
      %c0_20 = arith.constant 0 : index
      %25 = vector.load %arg10[%c0_19, %c0_20] : memref<8x24xf32, #tpu.memory_space<vmem>>, vector<8x24xf32>
      %26 = vector.extract_strided_slice %25 {offsets = [0, 0], sizes = [8, 16], strides = [1, 1]} : vector<8x24xf32> to vector<8x16xf32>
      %27 = vector.extract_strided_slice %24 {offsets = [0, 0], sizes = [8, 16], strides = [1, 1]} : vector<8x24xf32> to vector<8x16xf32>
      %28 = arith.mulf %26, %27 : vector<8x16xf32>
      %cst_21 = arith.constant dense<0.000000e+00> : vector<8xf32>
      %29 = vector.multi_reduction <add>, %28, %cst_21 [1] : vector<8x16xf32> to vector<8xf32>
      %30 = vector.shape_cast %29 : vector<8xf32> to vector<8x1xf32>
      %31 = vector.extract_strided_slice %24 {offsets = [0, 16], sizes = [8, 1], strides = [1, 1]} : vector<8x24xf32> to vector<8x1xf32>
      %32 = arith.addf %30, %31 : vector<8x1xf32>
      %33 = vector.extract_strided_slice %24 {offsets = [0, 17], sizes = [8, 1], strides = [1, 1]} : vector<8x24xf32> to vector<8x1xf32>
      %c0_22 = arith.constant 0 : index
      %c0_23 = arith.constant 0 : index
      %34 = vector.load %arg12[%c0_22, %c0_23] : memref<8x1xf32, #tpu.memory_space<vmem>>, vector<8x1xf32>
      %cst_24 = arith.constant 1.000000e-35 : f32
      %35 = vector.broadcast %cst_24 : f32 to vector<8x1xf32>
      %36 = arith.maximumf %34, %35 : vector<8x1xf32>
      %37 = math.log %36 : vector<8x1xf32>
      %38 = arith.mulf %33, %37 : vector<8x1xf32>
      %39 = arith.subf %38, %32 : vector<8x1xf32>
      %c0_25 = arith.constant 0 : index
      %c0_26 = arith.constant 0 : index
      %40 = vector.load %arg13[%c0_25, %c0_26] : memref<8x1xf32, #tpu.memory_space<vmem>>, vector<8x1xf32>
      %c0_27 = arith.constant 0 : index
      %c0_28 = arith.constant 0 : index
      %41 = vector.load %arg14[%c0_27, %c0_28] : memref<8x1xf32, #tpu.memory_space<vmem>>, vector<8x1xf32>
      %42 = arith.addf %39, %40 : vector<8x1xf32>
      %cst_29 = arith.constant 1.000000e+03 : f32
      %43 = vector.broadcast %cst_29 : f32 to vector<8x1xf32>
      %44 = arith.mulf %41, %43 : vector<8x1xf32>
      %45 = arith.addf %42, %44 : vector<8x1xf32>
      %46 = arith.addf %45, %41 : vector<8x1xf32>
      %cst_30 = arith.constant 0.000000e+00 : f32
      %47 = vector.broadcast %cst_30 : f32 to vector<8x128xf32>
      %c0_31 = arith.constant 0 : index
      %c0_32 = arith.constant 0 : index
      %48 = vector.load %arg9[%c0_31, %c0_32] : memref<8x128xf32, #tpu.memory_space<vmem>>, vector<8x128xf32>
      tpu.vector_store %arg9[%c0_31, %c0_32], %47 {strides = array<i32>} : memref<8x128xf32, #tpu.memory_space<vmem>>, vector<8x128xf32>,
      %c0_33 = arith.constant 0 : index
      %c0_34 = arith.constant 0 : index
      %49 = vector.load %arg9[%c0_33, %c0_34] : memref<8x128xf32, #tpu.memory_space<vmem>>, vector<8x1xf32>
      tpu.vector_store %arg9[%c0_33, %c0_34], %46 {strides = array<i32>} : memref<8x128xf32, #tpu.memory_space<vmem>>, vector<8x1xf32>,
      %c0_35 = arith.constant 0 : index
      %c1 = arith.constant 1 : index
      %50 = vector.load %arg9[%c0_35, %c1] : memref<8x128xf32, #tpu.memory_space<vmem>>, vector<8x1xf32>
      tpu.vector_store %arg9[%c0_35, %c1], %39 {strides = array<i32>} : memref<8x128xf32, #tpu.memory_space<vmem>>, vector<8x1xf32>,
      %c0_36 = arith.constant 0 : index
      %c2 = arith.constant 2 : index
      %51 = vector.load %arg9[%c0_36, %c2] : memref<8x128xf32, #tpu.memory_space<vmem>>, vector<8x1xf32>
      tpu.vector_store %arg9[%c0_36, %c2], %40 {strides = array<i32>} : memref<8x128xf32, #tpu.memory_space<vmem>>, vector<8x1xf32>,
      %c0_37 = arith.constant 0 : index
      %c3 = arith.constant 3 : index
      %52 = vector.load %arg9[%c0_37, %c3] : memref<8x128xf32, #tpu.memory_space<vmem>>, vector<8x1xf32>
      tpu.vector_store %arg9[%c0_37, %c3], %41 {strides = array<i32>} : memref<8x128xf32, #tpu.memory_space<vmem>>, vector<8x1xf32>,
      %c0_38 = arith.constant 0 : index
      %c0_39 = arith.constant 0 : index
      %53 = vector.load %arg15[%c0_38, %c0_39] : memref<8x4xf32, #tpu.memory_space<vmem>>, vector<8x4xf32>
      %c0_40 = arith.constant 0 : index
      %c4 = arith.constant 4 : index
      %54 = vector.load %arg9[%c0_40, %c4] : memref<8x128xf32, #tpu.memory_space<vmem>>, vector<8x4xf32>
      tpu.vector_store %arg9[%c0_40, %c4], %53 {strides = array<i32>} : memref<8x128xf32, #tpu.memory_space<vmem>>, vector<8x4xf32>,
    } else {
    }
    return
  }
  func.func @transform_0(%arg0: i32, %arg1: i32) -> (i32, i32, i32) {
    %c0_i32 = arith.constant 0 : i32
    %c0_i32_0 = arith.constant 0 : i32
    %c0_i32_1 = arith.constant 0 : i32
    return %arg0, %c0_i32, %c0_i32_0 : i32, i32, i32
  }
  func.func @transform_1(%arg0: i32, %arg1: i32) -> (i32, i32) {
    %c0_i32 = arith.constant 0 : i32
    %c0_i32_0 = arith.constant 0 : i32
    return %arg0, %c0_i32 : i32, i32
  }
  func.func @transform_2(%arg0: i32, %arg1: i32) -> (i32, i32) {
    %c0_i32 = arith.constant 0 : i32
    return %arg0, %arg1 : i32, i32
  }
  func.func @transform_3(%arg0: i32, %arg1: i32) -> (i32, i32) {
    %c0_i32 = arith.constant 0 : i32
    %c0_i32_0 = arith.constant 0 : i32
    return %arg0, %c0_i32 : i32, i32
  }
  func.func @transform_4(%arg0: i32, %arg1: i32) -> (i32, i32) {
    %c0_i32 = arith.constant 0 : i32
    %c0_i32_0 = arith.constant 0 : i32
    %c0_i32_1 = arith.constant 0 : i32
    return %c0_i32, %c0_i32_0 : i32, i32
  }
  func.func @transform_5(%arg0: i32, %arg1: i32) -> (i32, i32) {
    %c0_i32 = arith.constant 0 : i32
    %c0_i32_0 = arith.constant 0 : i32
    %c0_i32_1 = arith.constant 0 : i32
    return %c0_i32, %c0_i32_0 : i32, i32
  }
  func.func @transform_6(%arg0: i32, %arg1: i32) -> (i32, i32) {
    %c0_i32 = arith.constant 0 : i32
    %c0_i32_0 = arith.constant 0 : i32
    %c0_i32_1 = arith.constant 0 : i32
    return %c0_i32, %c0_i32_0 : i32, i32
  }
  func.func @transform_7(%arg0: i32, %arg1: i32) -> (i32, i32) {
    %c0_i32 = arith.constant 0 : i32
    %c0_i32_0 = arith.constant 0 : i32
    return %arg0, %c0_i32 : i32, i32
  }
}

</mosaic_0001>

<llo_original>
// kernel: tpu_custom_call.1
$region0: #{tpu_custom_call.1}
  #allocation0 [shape = 'u32[]', space=smem, size = 0x4, offset = 0x4, fixed_abs, tag = 'smem constant byte address 0x4 - core index']
  #allocation1 [shape = 'u32[144,128]{1,0:T(1,128)}', space=vmem, size = 0x12000, scoped, tag = 'internal scratch']
  #allocation2 [shape = 'f32[8,24]{1,0:T(8,128)}', space=vmem, size = 0x1000, scoped, tag = 'scratch operand']
  #allocation3 [shape = 'f32[8,24]{1,0:T(8,128)}', space=vmem, size = 0x1000, scoped, tag = 'scratch operand']
  #allocation4 [shape = 'f32[8,1]{1,0:T(8,128)}', space=vmem, size = 0x1000, scoped, tag = 'scratch operand']
  #allocation5 [shape = 'f32[8,1]{1,0:T(8,128)}', space=vmem, size = 0x1000, scoped, tag = 'scratch operand']
  #allocation6 [shape = 'f32[8,1]{1,0:T(8,128)}', space=vmem, size = 0x1000, scoped, tag = 'scratch operand']
  #allocation7 [shape = 'f32[8,4]{1,0:T(8,128)}', space=vmem, size = 0x1000, scoped, tag = 'scratch operand']
  %s0 = inlined_call_operand.hbm [shape: bf16[8,8,32], index: 0, kind: input, shape index: {}]
  %s1 = inlined_call_operand.hbm [shape: bf16[8,8], index: 1, kind: input, shape index: {}]
  %s2 = inlined_call_operand.hbm [shape: bf16[8,256], index: 2, kind: input, shape index: {}]
  %s3 = inlined_call_operand.vmem [shape: f32[8,16], index: 3, kind: input, shape index: {}]
  %s4 = inlined_call_operand.hbm [shape: bf16[32,36], index: 4, kind: input, shape index: {}]
  %s5 = inlined_call_operand.vmem [shape: f32[1,36], index: 5, kind: input, shape index: {}]
  %s6 = inlined_call_operand.hbm [shape: bf16[24,256], index: 6, kind: input, shape index: {}]
  %s7 = inlined_call_operand.hbm [shape: f32[8,128], index: 7, kind: output, shape index: {}]
  %s8 = sld [smem:[#allocation0]]
  $region66: #{tpu_custom_call.1} parent=0
    _
  %s10 = ssub.s32 1, %s8
  %s11 = scalar_select 0, %s10, %s8
  $region1: #{tpu_custom_call.1} parent=0
    #allocation8 [shape = 'u8[16384]{0}', space=vmem, size = 0x4000, scoped, tag = 'input window, operand 0, single buffered']
    #allocation9 [shape = 's32[1]{0}', space=sflag, size = 0x4, scoped, tag = 'scoped memory for tpu_custom_call.1']
    #allocation10 [shape = 's32[1]{0}', space=sflag, size = 0x4, scoped, tag = 'scoped memory for tpu_custom_call.1']
    #allocation11 [shape = 'u8[2048]{0}', space=vmem, size = 0x800, scoped, tag = 'input window, operand 1, single buffered']
    #allocation12 [shape = 's32[1]{0}', space=sflag, size = 0x4, scoped, tag = 'scoped memory for tpu_custom_call.1']
    #allocation13 [shape = 'u8[4096]{0}', space=vmem, size = 0x1000, scoped, tag = 'input window, operand 2, single buffered']
    #allocation14 [shape = 'u8[8192]{0}', space=vmem, size = 0x2000, scoped, tag = 'input window, operand 4, single buffered']
    #allocation15 [shape = 's32[1]{0}', space=sflag, size = 0x4, scoped, tag = 'scoped memory for tpu_custom_call.1']
    #allocation16 [shape = 'u8[12288]{0}', space=vmem, size = 0x3000, scoped, tag = 'input window, operand 6, single buffered']
    #allocation17 [shape = 'u8[4096]{0}', space=vmem, size = 0x1000, scoped, tag = 'output window, operand 0, single buffered']
    %12 = vsyncpa [#allocation9], 0
    %13 = vsyncpa [#allocation12], 0
    %14 = vsyncpa [#allocation15], 0
    %15 = vsyncpa [#allocation10], 0
    // Predicated region
    $region2: #{tpu_custom_call.1} parent=1 // pred_check
      _
    $region3: #{tpu_custom_call.1} parent=1 // pred_check_branch
      %17 = sbr.rel (0) target = $region5
    $region4: #{tpu_custom_call.1} parent=1 // pred_region
      %s19 = ssub.s32 512, 512
      %20 = vsyncadd [#allocation9], %s19
      %s21 = sshll.u32 [#allocation8], 4
      %s22 = int_to_ptr.vmem [resolvable:$true] %s21
      %27 = dma.hbm_to_vmem [thread:$0]  %s0, 512, %s22, [#allocation9], 64, 64, 4
    $region5: #{tpu_custom_call.1} parent=1 // pred_fallthru
      _
    // Predicated region
    $region6: #{tpu_custom_call.1} parent=1 // pred_check
      _
    $region7: #{tpu_custom_call.1} parent=1 // pred_check_branch
      %29 = sbr.rel (0) target = $region9
    $region8: #{tpu_custom_call.1} parent=1 // pred_region
      %s31 = ssub.s32 64, 64
      %32 = vsyncadd [#allocation12], %s31
      %s34 = sshll.u32 [#allocation11], 4
      %s35 = int_to_ptr.vmem [resolvable:$true] %s34
      %37 = dma.hbm_to_vmem [thread:$0]  %s1, 64, %s35, [#allocation12]
    $region9: #{tpu_custom_call.1} parent=1 // pred_fallthru
      _
    // Predicated region
    $region10: #{tpu_custom_call.1} parent=1 // pred_check
      _
    $region11: #{tpu_custom_call.1} parent=1 // pred_check_branch
      %39 = sbr.rel (0) target = $region13
    $region12: #{tpu_custom_call.1} parent=1 // pred_region
      %s41 = ssub.s32 128, 128
      %42 = vsyncadd [#allocation12], %s41
      %s44 = sshll.u32 [#allocation13], 4
      %s45 = int_to_ptr.vmem [resolvable:$true] %s44
      %47 = dma.hbm_to_vmem [thread:$0]  %s2, 128, %s45, [#allocation12]
    $region13: #{tpu_custom_call.1} parent=1 // pred_fallthru
      _
    // Predicated region
    $region14: #{tpu_custom_call.1} parent=1 // pred_check
      _
    $region15: #{tpu_custom_call.1} parent=1 // pred_check_branch
      %49 = sbr.rel (0) target = $region17
    $region16: #{tpu_custom_call.1} parent=1 // pred_region
      _
    $region17: #{tpu_custom_call.1} parent=1 // pred_fallthru
      _
    // Predicated region
    $region18: #{tpu_custom_call.1} parent=1 // pred_check
      _
    $region19: #{tpu_custom_call.1} parent=1 // pred_check_branch
      %51 = sbr.rel (0) target = $region21
    $region20: #{tpu_custom_call.1} parent=1 // pred_region
      %s53 = ssub.s32 256, 256
      %54 = vsyncadd [#allocation15], %s53
      %s55 = sshll.u32 [#allocation14], 4
      %s56 = int_to_ptr.vmem [resolvable:$true] %s55
      %61 = dma.hbm_to_vmem [thread:$0]  %s4, 256, %s56, [#allocation15], 64, 64, 4
    $region21: #{tpu_custom_call.1} parent=1 // pred_fallthru
      _
    // Predicated region
    $region22: #{tpu_custom_call.1} parent=1 // pred_check
      _
    $region23: #{tpu_custom_call.1} parent=1 // pred_check_branch
      %63 = sbr.rel (0) target = $region25
    $region24: #{tpu_custom_call.1} parent=1 // pred_region
      _
    $region25: #{tpu_custom_call.1} parent=1 // pred_fallthru
      _
    // Predicated region
    $region26: #{tpu_custom_call.1} parent=1 // pred_check
      _
    $region27: #{tpu_custom_call.1} parent=1 // pred_check_branch
      %65 = sbr.rel (0) target = $region29
    $region28: #{tpu_custom_call.1} parent=1 // pred_region
      %s67 = ssub.s32 384, 384
      %68 = vsyncadd [#allocation15], %s67
      %s69 = sshll.u32 [#allocation16], 4
      %s70 = int_to_ptr.vmem [resolvable:$true] %s69
      %75 = dma.hbm_to_vmem [thread:$0]  %s6, 384, %s70, [#allocation15], 128, 128, 8
    $region29: #{tpu_custom_call.1} parent=1 // pred_fallthru
      _
    // Predicated region
    $region30: #{tpu_custom_call.1} parent=1 // pred_check
      _
    $region31: #{tpu_custom_call.1} parent=1 // pred_check_branch
      %77 = sbr.rel (0) target = $region33
    $region32: #{tpu_custom_call.1} parent=1 // pred_region
      %78 = dma.done [#allocation9], 512
    $region33: #{tpu_custom_call.1} parent=1 // pred_fallthru
      _
    // Predicated region
    $region34: #{tpu_custom_call.1} parent=1 // pred_check
      _
    $region35: #{tpu_custom_call.1} parent=1 // pred_check_branch
      %80 = sbr.rel (0) target = $region37
    $region36: #{tpu_custom_call.1} parent=1 // pred_region
      %81 = dma.done [#allocation12], 64
    $region37: #{tpu_custom_call.1} parent=1 // pred_fallthru
      _
    // Predicated region
    $region38: #{tpu_custom_call.1} parent=1 // pred_check
      _
    $region39: #{tpu_custom_call.1} parent=1 // pred_check_branch
      %83 = sbr.rel (0) target = $region41
    $region40: #{tpu_custom_call.1} parent=1 // pred_region
      %84 = dma.done [#allocation12], 128
    $region41: #{tpu_custom_call.1} parent=1 // pred_fallthru
      _
    // Predicated region
    $region42: #{tpu_custom_call.1} parent=1 // pred_check
      _
    $region43: #{tpu_custom_call.1} parent=1 // pred_check_branch
      %86 = sbr.rel (0) target = $region45
    $region44: #{tpu_custom_call.1} parent=1 // pred_region
      %87 = dma.done [#allocation15], 256
    $region45: #{tpu_custom_call.1} parent=1 // pred_fallthru
      _
    // Predicated region
    $region46: #{tpu_custom_call.1} parent=1 // pred_check
      _
    $region47: #{tpu_custom_call.1} parent=1 // pred_check_branch
      %89 = sbr.rel (0) target = $region49
    $region48: #{tpu_custom_call.1} parent=1 // pred_region
      %90 = dma.done [#allocation15], 384
    $region49: #{tpu_custom_call.1} parent=1 // pred_fallthru
      _
    %p92 = scmp.eq.s32.totalorder 0, 0
    // Predicated region
    $region50: #{tpu_custom_call.1} parent=1 // pred_check
      %p93 = pneg %p92
    $region51: #{tpu_custom_call.1} parent=1 // pred_check_branch
      %95 = sbr.rel (%p93) target = $region53
    $region52: #{tpu_custom_call.1} parent=1 // pred_region
      %v96 = vld [vmem:[#allocation8] sm:$0xf]
      %v97 = vld [vmem:[#allocation8 + $0x4] sm:$0xf]
      %v98 = vld [vmem:[#allocation8 + $0x8] sm:$0xf]
      %v99 = vld [vmem:[#allocation8 + $0xc] sm:$0xf]
      %v100 = vld [vmem:[#allocation8 + $0x10] sm:$0xf]
      %v101 = vld [vmem:[#allocation8 + $0x14] sm:$0xf]
      %v102 = vld [vmem:[#allocation8 + $0x18] sm:$0xf]
      %v103 = vld [vmem:[#allocation8 + $0x1c] sm:$0xf]
      %v104 = vld [vmem:[#allocation11] sm:$0xf]
      %v107 = vunpack.c.l.s4 1966171168
      %v108 = vunpack.c.0.s8 %v107
      %v109 = vlaneseq
      %v110 = vshrl.u32 %v109, 7
      %v111 = vsub.s32 %v108, %v110
      %v112 = vrot.slane %v104, %v111
      %v113 = vcombine.high %v112, %v112
      %v115 = vunpack.c.l.s4 1966171168
      %v116 = vunpack.c.0.s8 %v115
      %v117 = vlaneseq
      %v118 = vshrl.u32 %v117, 7
      %v119 = vsub.s32 %v116, %v118
      %v120 = vrot.slane %v112, %v119
      %v122 = vunpack.c.l.s4 1966171168
      %v123 = vunpack.c.0.s8 %v122
      %v124 = vlaneseq
      %v125 = vshrl.u32 %v124, 7
      %v126 = vsub.s32 %v123, %v125
      %v127 = vrot.slane %v113, %v126
      %v128 = vcombine.high %v120, %v120
      %v129 = vcombine.high %v127, %v127
      %v130 = vunpack.i.l.s16 %v120
      %v131 = vunpack.i.h.s16 %v120
      %v132 = vunpack.i.l.s16 %v127
      %v133 = vunpack.i.h.s16 %v127
      %v134 = vunpack.i.l.s16 %v128
      %v135 = vunpack.i.h.s16 %v128
      %v136 = vunpack.i.l.s16 %v129
      %v137 = vunpack.i.h.s16 %v129
      %v138 = vpack.i.b16 %v130, %v130
      %v139 = vlaneseq
      %v140 = vshrl.u32 %v139, 7
      %v141 = vsub.s32 0, %v140
      %v142 = vrot.slane %v138, %v141
      %vm143 = vcmask 64512
      %v145 = vsel %vm143, %v142, 0
      %vm147 = vcmask 1043456
      %v149 = vsel %vm147, %v96, 0
      %151 = vmatprep.subr.bf16.mxu0 0
      %152 = vmatpush1.bf16.msra.mxu0 %v149
      %153 = vmatprep.subr.bf16.mxu0 0
      %154 = vmatpush1.bf16.msra.mxu0 0
      %155 = vmatprep.subr.bf16.mxu0 0
      %156 = vmatpush1.bf16.msra.mxu0 0
      %157 = vmatprep.subr.bf16.mxu0 0
      %158 = vmatpush1.bf16.msra.mxu0 0
      %159 = vmatprep.subr.bf16.mxu0 0
      %160 = vmatpush1.bf16.msra.mxu0 0
      %161 = vmatprep.subr.bf16.mxu0 0
      %162 = vmatpush1.bf16.msra.mxu0 0
      %163 = vmatprep.subr.bf16.mxu0 0
      %164 = vmatpush1.bf16.msra.mxu0 0
      %165 = vmatprep.subr.bf16.mxu0 0
      %166 = vmatpush1.bf16.msra.mxu0 0
      %167 = vmatprep.subr.bf16.mxu0 0
      %168 = vmatpush1.bf16.msra.mxu0 0
      %169 = vmatprep.subr.bf16.mxu0 0
      %170 = vmatpush1.bf16.msra.mxu0 0
      %171 = vmatprep.subr.bf16.mxu0 0
      %172 = vmatpush1.bf16.msra.mxu0 0
      %173 = vmatprep.subr.bf16.mxu0 0
      %174 = vmatpush1.bf16.msra.mxu0 0
      %175 = vmatprep.subr.bf16.mxu0 0
      %176 = vmatpush1.bf16.msra.mxu0 0
      %177 = vmatprep.subr.bf16.mxu0 0
      %178 = vmatpush1.bf16.msra.mxu0 0
      %179 = vmatprep.subr.bf16.mxu0 0
      %180 = vmatpush1.bf16.msra.mxu0 0
      %181 = vmatprep.subr.bf16.mxu0 0
      %182 = vmatpush1.bf16.msra.mxu0 0
      %183 = vmatprep.mubr.bf16.mxu0 0
      %184 = vmatmul.mubr.bf16.gmra.mrb[0].mxu0 %v145
      %v185 = vpop.f32.mrb[0].mxu0
      %v186 = vadd.f32 0.0, %v185
      %v187 = vpop.f32.mrb[0].mxu0
      %v188 = vpop.f32.mrb[0].mxu0
      %v189 = vpop.f32.mrb[0].mxu0
      %190 = vdwg.mxu0
      %v191 = vpack.i.b16 %v131, %v131
      %v192 = vlaneseq
      %v193 = vshrl.u32 %v192, 7
      %v194 = vsub.s32 0, %v193
      %v195 = vrot.slane %v191, %v194
      %v197 = vsel %vm143, %v195, 0
      %v200 = vsel %vm147, %v97, 0
      %202 = vmatprep.subr.bf16.mxu0 0
      %203 = vmatpush1.bf16.msra.mxu0 %v200
      %204 = vmatprep.subr.bf16.mxu0 0
      %205 = vmatpush1.bf16.msra.mxu0 0
      %206 = vmatprep.subr.bf16.mxu0 0
      %207 = vmatpush1.bf16.msra.mxu0 0
      %208 = vmatprep.subr.bf16.mxu0 0
      %209 = vmatpush1.bf16.msra.mxu0 0
      %210 = vmatprep.subr.bf16.mxu0 0
      %211 = vmatpush1.bf16.msra.mxu0 0
      %212 = vmatprep.subr.bf16.mxu0 0
      %213 = vmatpush1.bf16.msra.mxu0 0
      %214 = vmatprep.subr.bf16.mxu0 0
      %215 = vmatpush1.bf16.msra.mxu0 0
      %216 = vmatprep.subr.bf16.mxu0 0
      %217 = vmatpush1.bf16.msra.mxu0 0
      %218 = vmatprep.subr.bf16.mxu0 0
      %219 = vmatpush1.bf16.msra.mxu0 0
      %220 = vmatprep.subr.bf16.mxu0 0
      %221 = vmatpush1.bf16.msra.mxu0 0
      %222 = vmatprep.subr.bf16.mxu0 0
      %223 = vmatpush1.bf16.msra.mxu0 0
      %224 = vmatprep.subr.bf16.mxu0 0
      %225 = vmatpush1.bf16.msra.mxu0 0
      %226 = vmatprep.subr.bf16.mxu0 0
      %227 = vmatpush1.bf16.msra.mxu0 0
      %228 = vmatprep.subr.bf16.mxu0 0
      %229 = vmatpush1.bf16.msra.mxu0 0
      %230 = vmatprep.subr.bf16.mxu0 0
      %231 = vmatpush1.bf16.msra.mxu0 0
      %232 = vmatprep.subr.bf16.mxu0 0
      %233 = vmatpush1.bf16.msra.mxu0 0
      %234 = vmatprep.mubr.bf16.mxu0 0
      %235 = vmatmul.mubr.bf16.gmra.mrb[0].mxu0 %v197
      %v236 = vpop.f32.mrb[0].mxu0
      %v237 = vadd.f32 0.0, %v236
      %v238 = vpop.f32.mrb[0].mxu0
      %v239 = vpop.f32.mrb[0].mxu0
      %v240 = vpop.f32.mrb[0].mxu0
      %241 = vdwg.mxu0
      %v242 = vpack.i.b16 %v132, %v132
      %v243 = vlaneseq
      %v244 = vshrl.u32 %v243, 7
      %v245 = vsub.s32 0, %v244
      %v246 = vrot.slane %v242, %v245
      %v248 = vsel %vm143, %v246, 0
      %v251 = vsel %vm147, %v98, 0
      %253 = vmatprep.subr.bf16.mxu0 0
      %254 = vmatpush1.bf16.msra.mxu0 %v251
      %255 = vmatprep.subr.bf16.mxu0 0
      %256 = vmatpush1.bf16.msra.mxu0 0
      %257 = vmatprep.subr.bf16.mxu0 0
      %258 = vmatpush1.bf16.msra.mxu0 0
      %259 = vmatprep.subr.bf16.mxu0 0
      %260 = vmatpush1.bf16.msra.mxu0 0
      %261 = vmatprep.subr.bf16.mxu0 0
      %262 = vmatpush1.bf16.msra.mxu0 0
      %263 = vmatprep.subr.bf16.mxu0 0
      %264 = vmatpush1.bf16.msra.mxu0 0
      %265 = vmatprep.subr.bf16.mxu0 0
      %266 = vmatpush1.bf16.msra.mxu0 0
      %267 = vmatprep.subr.bf16.mxu0 0
      %268 = vmatpush1.bf16.msra.mxu0 0
      %269 = vmatprep.subr.bf16.mxu0 0
      %270 = vmatpush1.bf16.msra.mxu0 0
      %271 = vmatprep.subr.bf16.mxu0 0
      %272 = vmatpush1.bf16.msra.mxu0 0
      %273 = vmatprep.subr.bf16.mxu0 0
      %274 = vmatpush1.bf16.msra.mxu0 0
      %275 = vmatprep.subr.bf16.mxu0 0
      %276 = vmatpush1.bf16.msra.mxu0 0
      %277 = vmatprep.subr.bf16.mxu0 0
      %278 = vmatpush1.bf16.msra.mxu0 0
      %279 = vmatprep.subr.bf16.mxu0 0
      %280 = vmatpush1.bf16.msra.mxu0 0
      %281 = vmatprep.subr.bf16.mxu0 0
      %282 = vmatpush1.bf16.msra.mxu0 0
      %283 = vmatprep.subr.bf16.mxu0 0
      %284 = vmatpush1.bf16.msra.mxu0 0
      %285 = vmatprep.mubr.bf16.mxu0 0
      %286 = vmatmul.mubr.bf16.gmra.mrb[0].mxu0 %v248
      %v287 = vpop.f32.mrb[0].mxu0
      %v288 = vadd.f32 0.0, %v287
      %v289 = vpop.f32.mrb[0].mxu0
      %v290 = vpop.f32.mrb[0].mxu0
      %v291 = vpop.f32.mrb[0].mxu0
      %292 = vdwg.mxu0
      %v293 = vpack.i.b16 %v133, %v133
      %v294 = vlaneseq
      %v295 = vshrl.u32 %v294, 7
      %v296 = vsub.s32 0, %v295
      %v297 = vrot.slane %v293, %v296
      %v299 = vsel %vm143, %v297, 0
      %v302 = vsel %vm147, %v99, 0
      %304 = vmatprep.subr.bf16.mxu0 0
      %305 = vmatpush1.bf16.msra.mxu0 %v302
      %306 = vmatprep.subr.bf16.mxu0 0
      %307 = vmatpush1.bf16.msra.mxu0 0
      %308 = vmatprep.subr.bf16.mxu0 0
      %309 = vmatpush1.bf16.msra.mxu0 0
      %310 = vmatprep.subr.bf16.mxu0 0
      %311 = vmatpush1.bf16.msra.mxu0 0
      %312 = vmatprep.subr.bf16.mxu0 0
      %313 = vmatpush1.bf16.msra.mxu0 0
      %314 = vmatprep.subr.bf16.mxu0 0
      %315 = vmatpush1.bf16.msra.mxu0 0
      %316 = vmatprep.subr.bf16.mxu0 0
      %317 = vmatpush1.bf16.msra.mxu0 0
      %318 = vmatprep.subr.bf16.mxu0 0
      %319 = vmatpush1.bf16.msra.mxu0 0
      %320 = vmatprep.subr.bf16.mxu0 0
      %321 = vmatpush1.bf16.msra.mxu0 0
      %322 = vmatprep.subr.bf16.mxu0 0
      %323 = vmatpush1.bf16.msra.mxu0 0
      %324 = vmatprep.subr.bf16.mxu0 0
      %325 = vmatpush1.bf16.msra.mxu0 0
      %326 = vmatprep.subr.bf16.mxu0 0
      %327 = vmatpush1.bf16.msra.mxu0 0
      %328 = vmatprep.subr.bf16.mxu0 0
      %329 = vmatpush1.bf16.msra.mxu0 0
      %330 = vmatprep.subr.bf16.mxu0 0
      %331 = vmatpush1.bf16.msra.mxu0 0
      %332 = vmatprep.subr.bf16.mxu0 0
      %333 = vmatpush1.bf16.msra.mxu0 0
      %334 = vmatprep.subr.bf16.mxu0 0
      %335 = vmatpush1.bf16.msra.mxu0 0
      %336 = vmatprep.mubr.bf16.mxu0 0
      %337 = vmatmul.mubr.bf16.gmra.mrb[0].mxu0 %v299
      %v338 = vpop.f32.mrb[0].mxu0
      %v339 = vadd.f32 0.0, %v338
      %v340 = vpop.f32.mrb[0].mxu0
      %v341 = vpop.f32.mrb[0].mxu0
      %v342 = vpop.f32.mrb[0].mxu0
      %343 = vdwg.mxu0
      %v344 = vpack.i.b16 %v134, %v134
      %v345 = vlaneseq
      %v346 = vshrl.u32 %v345, 7
      %v347 = vsub.s32 0, %v346
      %v348 = vrot.slane %v344, %v347
      %v350 = vsel %vm143, %v348, 0
      %v353 = vsel %vm147, %v100, 0
      %355 = vmatprep.subr.bf16.mxu0 0
      %356 = vmatpush1.bf16.msra.mxu0 %v353
      %357 = vmatprep.subr.bf16.mxu0 0
      %358 = vmatpush1.bf16.msra.mxu0 0
      %359 = vmatprep.subr.bf16.mxu0 0
      %360 = vmatpush1.bf16.msra.mxu0 0
      %361 = vmatprep.subr.bf16.mxu0 0
      %362 = vmatpush1.bf16.msra.mxu0 0
      %363 = vmatprep.subr.bf16.mxu0 0
      %364 = vmatpush1.bf16.msra.mxu0 0
      %365 = vmatprep.subr.bf16.mxu0 0
      %366 = vmatpush1.bf16.msra.mxu0 0
      %367 = vmatprep.subr.bf16.mxu0 0
      %368 = vmatpush1.bf16.msra.mxu0 0
      %369 = vmatprep.subr.bf16.mxu0 0
      %370 = vmatpush1.bf16.msra.mxu0 0
      %371 = vmatprep.subr.bf16.mxu0 0
      %372 = vmatpush1.bf16.msra.mxu0 0
      %373 = vmatprep.subr.bf16.mxu0 0
      %374 = vmatpush1.bf16.msra.mxu0 0
      %375 = vmatprep.subr.bf16.mxu0 0
      %376 = vmatpush1.bf16.msra.mxu0 0
      %377 = vmatprep.subr.bf16.mxu0 0
      %378 = vmatpush1.bf16.msra.mxu0 0
      %379 = vmatprep.subr.bf16.mxu0 0
      %380 = vmatpush1.bf16.msra.mxu0 0
      %381 = vmatprep.subr.bf16.mxu0 0
      %382 = vmatpush1.bf16.msra.mxu0 0
      %383 = vmatprep.subr.bf16.mxu0 0
      %384 = vmatpush1.bf16.msra.mxu0 0
      %385 = vmatprep.subr.bf16.mxu0 0
      %386 = vmatpush1.bf16.msra.mxu0 0
      %387 = vmatprep.mubr.bf16.mxu0 0
      %388 = vmatmul.mubr.bf16.gmra.mrb[0].mxu0 %v350
      %v389 = vpop.f32.mrb[0].mxu0
      %v390 = vadd.f32 0.0, %v389
      %v391 = vpop.f32.mrb[0].mxu0
      %v392 = vpop.f32.mrb[0].mxu0
      %v393 = vpop.f32.mrb[0].mxu0
      %394 = vdwg.mxu0
      %v395 = vpack.i.b16 %v135, %v135
      %v396 = vlaneseq
      %v397 = vshrl.u32 %v396, 7
      %v398 = vsub.s32 0, %v397
      %v399 = vrot.slane %v395, %v398
      %v401 = vsel %vm143, %v399, 0
      %v404 = vsel %vm147, %v101, 0
      %406 = vmatprep.subr.bf16.mxu0 0
      %407 = vmatpush1.bf16.msra.mxu0 %v404
      %408 = vmatprep.subr.bf16.mxu0 0
      %409 = vmatpush1.bf16.msra.mxu0 0
      %410 = vmatprep.subr.bf16.mxu0 0
      %411 = vmatpush1.bf16.msra.mxu0 0
      %412 = vmatprep.subr.bf16.mxu0 0
      %413 = vmatpush1.bf16.msra.mxu0 0
      %414 = vmatprep.subr.bf16.mxu0 0
      %415 = vmatpush1.bf16.msra.mxu0 0
      %416 = vmatprep.subr.bf16.mxu0 0
      %417 = vmatpush1.bf16.msra.mxu0 0
      %418 = vmatprep.subr.bf16.mxu0 0
      %419 = vmatpush1.bf16.msra.mxu0 0
      %420 = vmatprep.subr.bf16.mxu0 0
      %421 = vmatpush1.bf16.msra.mxu0 0
      %422 = vmatprep.subr.bf16.mxu0 0
      %423 = vmatpush1.bf16.msra.mxu0 0
      %424 = vmatprep.subr.bf16.mxu0 0
      %425 = vmatpush1.bf16.msra.mxu0 0
      %426 = vmatprep.subr.bf16.mxu0 0
      %427 = vmatpush1.bf16.msra.mxu0 0
      %428 = vmatprep.subr.bf16.mxu0 0
      %429 = vmatpush1.bf16.msra.mxu0 0
      %430 = vmatprep.subr.bf16.mxu0 0
      %431 = vmatpush1.bf16.msra.mxu0 0
      %432 = vmatprep.subr.bf16.mxu0 0
      %433 = vmatpush1.bf16.msra.mxu0 0
      %434 = vmatprep.subr.bf16.mxu0 0
      %435 = vmatpush1.bf16.msra.mxu0 0
      %436 = vmatprep.subr.bf16.mxu0 0
      %437 = vmatpush1.bf16.msra.mxu0 0
      %438 = vmatprep.mubr.bf16.mxu0 0
      %439 = vmatmul.mubr.bf16.gmra.mrb[0].mxu0 %v401
      %v440 = vpop.f32.mrb[0].mxu0
      %v441 = vadd.f32 0.0, %v440
      %v442 = vpop.f32.mrb[0].mxu0
      %v443 = vpop.f32.mrb[0].mxu0
      %v444 = vpop.f32.mrb[0].mxu0
      %445 = vdwg.mxu0
      %v446 = vpack.i.b16 %v136, %v136
      %v447 = vlaneseq
      %v448 = vshrl.u32 %v447, 7
      %v449 = vsub.s32 0, %v448
      %v450 = vrot.slane %v446, %v449
      %v452 = vsel %vm143, %v450, 0
      %v455 = vsel %vm147, %v102, 0
      %457 = vmatprep.subr.bf16.mxu0 0
      %458 = vmatpush1.bf16.msra.mxu0 %v455
      %459 = vmatprep.subr.bf16.mxu0 0
      %460 = vmatpush1.bf16.msra.mxu0 0
      %461 = vmatprep.subr.bf16.mxu0 0
      %462 = vmatpush1.bf16.msra.mxu0 0
      %463 = vmatprep.subr.bf16.mxu0 0
      %464 = vmatpush1.bf16.msra.mxu0 0
      %465 = vmatprep.subr.bf16.mxu0 0
      %466 = vmatpush1.bf16.msra.mxu0 0
      %467 = vmatprep.subr.bf16.mxu0 0
      %468 = vmatpush1.bf16.msra.mxu0 0
      %469 = vmatprep.subr.bf16.mxu0 0
      %470 = vmatpush1.bf16.msra.mxu0 0
      %471 = vmatprep.subr.bf16.mxu0 0
      %472 = vmatpush1.bf16.msra.mxu0 0
      %473 = vmatprep.subr.bf16.mxu0 0
      %474 = vmatpush1.bf16.msra.mxu0 0
      %475 = vmatprep.subr.bf16.mxu0 0
      %476 = vmatpush1.bf16.msra.mxu0 0
      %477 = vmatprep.subr.bf16.mxu0 0
      %478 = vmatpush1.bf16.msra.mxu0 0
      %479 = vmatprep.subr.bf16.mxu0 0
      %480 = vmatpush1.bf16.msra.mxu0 0
      %481 = vmatprep.subr.bf16.mxu0 0
      %482 = vmatpush1.bf16.msra.mxu0 0
      %483 = vmatprep.subr.bf16.mxu0 0
      %484 = vmatpush1.bf16.msra.mxu0 0
      %485 = vmatprep.subr.bf16.mxu0 0
      %486 = vmatpush1.bf16.msra.mxu0 0
      %487 = vmatprep.subr.bf16.mxu0 0
      %488 = vmatpush1.bf16.msra.mxu0 0
      %489 = vmatprep.mubr.bf16.mxu0 0
      %490 = vmatmul.mubr.bf16.gmra.mrb[0].mxu0 %v452
      %v491 = vpop.f32.mrb[0].mxu0
      %v492 = vadd.f32 0.0, %v491
      %v493 = vpop.f32.mrb[0].mxu0
      %v494 = vpop.f32.mrb[0].mxu0
      %v495 = vpop.f32.mrb[0].mxu0
      %496 = vdwg.mxu0
      %v497 = vpack.i.b16 %v137, %v137
      %v498 = vlaneseq
      %v499 = vshrl.u32 %v498, 7
      %v500 = vsub.s32 0, %v499
      %v501 = vrot.slane %v497, %v500
      %v503 = vsel %vm143, %v501, 0
      %v506 = vsel %vm147, %v103, 0
      %508 = vmatprep.subr.bf16.mxu0 0
      %509 = vmatpush1.bf16.msra.mxu0 %v506
      %510 = vmatprep.subr.bf16.mxu0 0
      %511 = vmatpush1.bf16.msra.mxu0 0
      %512 = vmatprep.subr.bf16.mxu0 0
      %513 = vmatpush1.bf16.msra.mxu0 0
      %514 = vmatprep.subr.bf16.mxu0 0
      %515 = vmatpush1.bf16.msra.mxu0 0
      %516 = vmatprep.subr.bf16.mxu0 0
      %517 = vmatpush1.bf16.msra.mxu0 0
      %518 = vmatprep.subr.bf16.mxu0 0
      %519 = vmatpush1.bf16.msra.mxu0 0
      %520 = vmatprep.subr.bf16.mxu0 0
      %521 = vmatpush1.bf16.msra.mxu0 0
      %522 = vmatprep.subr.bf16.mxu0 0
      %523 = vmatpush1.bf16.msra.mxu0 0
      %524 = vmatprep.subr.bf16.mxu0 0
      %525 = vmatpush1.bf16.msra.mxu0 0
      %526 = vmatprep.subr.bf16.mxu0 0
      %527 = vmatpush1.bf16.msra.mxu0 0
      %528 = vmatprep.subr.bf16.mxu0 0
      %529 = vmatpush1.bf16.msra.mxu0 0
      %530 = vmatprep.subr.bf16.mxu0 0
      %531 = vmatpush1.bf16.msra.mxu0 0
      %532 = vmatprep.subr.bf16.mxu0 0
      %533 = vmatpush1.bf16.msra.mxu0 0
      %534 = vmatprep.subr.bf16.mxu0 0
      %535 = vmatpush1.bf16.msra.mxu0 0
      %536 = vmatprep.subr.bf16.mxu0 0
      %537 = vmatpush1.bf16.msra.mxu0 0
      %538 = vmatprep.subr.bf16.mxu0 0
      %539 = vmatpush1.bf16.msra.mxu0 0
      %540 = vmatprep.mubr.bf16.mxu0 0
      %541 = vmatmul.mubr.bf16.gmra.mrb[0].mxu0 %v503
      %v542 = vpop.f32.mrb[0].mxu0
      %v543 = vadd.f32 0.0, %v542
      %v544 = vpop.f32.mrb[0].mxu0
      %v545 = vpop.f32.mrb[0].mxu0
      %v546 = vpop.f32.mrb[0].mxu0
      %547 = vdwg.mxu0
      %v548 = vunpack.c.l.bf16 %v104
      %v549 = vsel %vm143, %v548, 0.0
      %550 = vadd.xlane.f32.xlu0 %v549
      %v551 = vpop.xlane.xlu0 %550
      %v552 = vmax.f32 %v551, 1e-09
      %v554 = vrot.slane %v552, 1
      %v555 = vrot.slane %v552, 2
      %v556 = vrot.slane %v552, 3
      %v557 = vrot.slane %v552, 4
      %v558 = vrot.slane %v552, 5
      %v559 = vrot.slane %v552, 6
      %v560 = vrot.slane %v552, 7
      %v569 = vrcp.pop %v552
      %v570 = vmul.f32 %v186, %v569
      %v571 = vrcp.pop %v554
      %v572 = vmul.f32 %v237, %v571
      %v573 = vrcp.pop %v555
      %v574 = vmul.f32 %v288, %v573
      %v575 = vrcp.pop %v556
      %v576 = vmul.f32 %v339, %v575
      %v577 = vrcp.pop %v557
      %v578 = vmul.f32 %v390, %v577
      %v579 = vrcp.pop %v558
      %v580 = vmul.f32 %v441, %v579
      %v581 = vrcp.pop %v559
      %v582 = vmul.f32 %v492, %v581
      %v583 = vrcp.pop %v560
      %v584 = vmul.f32 %v543, %v583
      %v585 = vpack.c.bf16 %v570, %v570
      %v586 = vpack.c.bf16 %v572, %v572
      %v587 = vpack.c.bf16 %v574, %v574
      %v588 = vpack.c.bf16 %v576, %v576
      %v589 = vpack.c.bf16 %v578, %v578
      %v590 = vpack.c.bf16 %v580, %v580
      %v591 = vpack.c.bf16 %v582, %v582
      %v592 = vpack.c.bf16 %v584, %v584
      %v593 = vld [vmem:[#allocation14] sm:$0xf]
      %v594 = vld [vmem:[#allocation14 + $0x4] sm:$0xf]
      %v595 = vld [vmem:[#allocation14 + $0x8] sm:$0xf]
      %v596 = vld [vmem:[#allocation14 + $0xc] sm:$0xf]
      %v597 = vld [vmem:[%s5] sm:$0x1]
      %v599 = vlaneseq
      %v600 = vshrl.u32 %v599, 7
      %v601 = vsub.s32 0, %v600
      %v602 = vrot.slane %v597, %v601
      %v612 = vunpack.c.l.b16 %v585
      %v613 = vunpack.c.l.b16 %v586
      %v614 = vunpack.c.l.b16 %v587
      %v615 = vunpack.c.l.b16 %v588
      %v616 = vunpack.c.l.b16 %v589
      %v617 = vunpack.c.l.b16 %v590
      %v618 = vunpack.c.l.b16 %v591
      %v619 = vunpack.c.l.b16 %v592
      %v620 = vrot.slane %v613, 7
      %vm621 = vcmask 1041409
      %v622 = vsel %vm621, %v620, %v612
      %v623 = vrot.slane %v614, 6
      %vm624 = vcmask 1042434
      %v625 = vsel %vm624, %v623, %v622
      %v626 = vrot.slane %v615, 5
      %vm627 = vcmask 1043459
      %v628 = vsel %vm627, %v626, %v625
      %v629 = vrot.slane %v616, 4
      %vm630 = vcmask 1044484
      %v631 = vsel %vm630, %v629, %v628
      %v632 = vrot.slane %v617, 3
      %vm633 = vcmask 1045509
      %v634 = vsel %vm633, %v632, %v631
      %v635 = vrot.slane %v618, 2
      %vm636 = vcmask 1046534
      %v637 = vsel %vm636, %v635, %v634
      %v638 = vrot.slane %v619, 1
      %vm639 = vcmask 1047559
      %v640 = vsel %vm639, %v638, %v637
      %v641 = vpack.c.b16 %v640, %v640
      %v646 = vunpack.c.l.b16 %v593
      %v647 = vunpack.c.l.b16 %v594
      %v648 = vunpack.c.l.b16 %v595
      %v649 = vunpack.c.l.b16 %v596
      %v650 = vpack.c.b16 %v647, %v646
      %v651 = vpack.c.b16 %v649, %v648
      %vm654 = vcmask 261120
      %v656 = vsel %vm654, %v641, 0
      %658 = vmatprep.subr.bf16.mxu0 0
      %659 = vmatpush1.bf16.msra.mxu0 %v650
      %660 = vmatprep.subr.bf16.mxu0 0
      %661 = vmatpush1.bf16.msra.mxu0 %v651
      %662 = vmatprep.subr.bf16.mxu0 0
      %663 = vmatpush1.bf16.msra.mxu0 0
      %664 = vmatprep.subr.bf16.mxu0 0
      %665 = vmatpush1.bf16.msra.mxu0 0
      %666 = vmatprep.subr.bf16.mxu0 0
      %667 = vmatpush1.bf16.msra.mxu0 0
      %668 = vmatprep.subr.bf16.mxu0 0
      %669 = vmatpush1.bf16.msra.mxu0 0
      %670 = vmatprep.subr.bf16.mxu0 0
      %671 = vmatpush1.bf16.msra.mxu0 0
      %672 = vmatprep.subr.bf16.mxu0 0
      %673 = vmatpush1.bf16.msra.mxu0 0
      %674 = vmatprep.subr.bf16.mxu0 0
      %675 = vmatpush1.bf16.msra.mxu0 0
      %676 = vmatprep.subr.bf16.mxu0 0
      %677 = vmatpush1.bf16.msra.mxu0 0
      %678 = vmatprep.subr.bf16.mxu0 0
      %679 = vmatpush1.bf16.msra.mxu0 0
      %680 = vmatprep.subr.bf16.mxu0 0
      %681 = vmatpush1.bf16.msra.mxu0 0
      %682 = vmatprep.subr.bf16.mxu0 0
      %683 = vmatpush1.bf16.msra.mxu0 0
      %684 = vmatprep.subr.bf16.mxu0 0
      %685 = vmatpush1.bf16.msra.mxu0 0
      %686 = vmatprep.subr.bf16.mxu0 0
      %687 = vmatpush1.bf16.msra.mxu0 0
      %688 = vmatprep.subr.bf16.mxu0 0
      %689 = vmatpush1.bf16.msra.mxu0 0
      %690 = vmatprep.mubr.bf16.mxu0 0
      %691 = vmatmul.mubr.bf16.gmra.mrb[0].mxu0 %v656
      %v692 = vpop.f32.mrb[0].mxu0
      %v693 = vadd.f32 %v602, %v692
      %v694 = vpop.f32.mrb[0].mxu0
      %v695 = vpop.f32.mrb[0].mxu0
      %v696 = vpop.f32.mrb[0].mxu0
      %697 = vdwg.mxu0
      %699 = vrot.lane.b32.xlu0 %v693, 96
      %v700 = vpop.permute.xlu0 %699
      %vm702 = vcmask 31744
      %703 = vst.msk [vmem:[#allocation7] sm:$0xff] %vm702, %v700
      %v704 = vmul.f32 %v693, 0.5
      %v705 = vmul.f32 %v704, 1.442695
      %v706 = vpow.pop %v705
      %v707 = vld [vmem:[%s3] sm:$0xff]
      %709 = vrot.lane.b32.xlu0 %v707, 16
      %v710 = vpop.permute.xlu0 %709
      %v712 = vmul.f32 %v706, %v710
      %714 = vrot.lane.b32.xlu0 %v712, 112
      %v715 = vpop.permute.xlu0 %714
      %v717 = vadd.f32 %v693, %v715
      %v718 = vmul.f32 %v706, %v706
      %v719 = vmul.f32 %v718, 1.1377778
      %v720 = vmul.f32 %v693, %v693
      %v721 = vmul.f32 %v720, 1.1377778
      %723 = vrot.lane.b32.xlu0 %v721, 16
      %v724 = vpop.permute.xlu0 %723
      %v726 = vadd.f32 %v719, %v724
      %v727 = vadd.f32 %v726, -0.12907705
      %v728 = vsub.f32 %v727, %v693
      %730 = vrot.lane.b32.xlu0 %v728, 112
      %v731 = vpop.permute.xlu0 %730
      %vm733 = vcmask 130048
      %v734 = vsel %vm733, %v731, 0.0
      %735 = vadd.xlane.f32.xlu0 %v734
      %v736 = vpop.xlane.xlu0 %735
      %v737 = vsub.f32 %v736, 16.0
      %v738 = vmul.f32 %v737, 0.5
      %v739 = vmul.f32 %v738, 0.1
      %vm740 = vcmask 7168
      %741 = vst.msk [vmem:[#allocation5] sm:$0xff] %vm740, %v739
      %v742 = vsel %vm733, %v717, -inf
      %743 = vmax.xlane.f32.xlu0 %v742
      %v744 = vpop.xlane.xlu0 %743
      %v745 = vsub.f32 %v717, %v744
      %v746 = vmul.f32 %v745, 1.442695
      %v747 = vpow.pop %v746
      %v748 = vsel %vm733, %v747, 0.0
      %749 = vadd.xlane.f32.xlu0 %v748
      %v750 = vpop.xlane.xlu0 %749
      %v751 = vrcp.pop %v750
      %v752 = vmul.f32 %v747, %v751
      %v753 = vmax.f32 %v752, 1e-30
      %v754 = vlog2.pop %v753
      %v755 = vmul.f32 %v754, 0.6931472
      %v756 = vmul.f32 %v752, %v755
      %v757 = vsel %vm733, %v756, 0.0
      %758 = vadd.xlane.f32.xlu0 %v757
      %v759 = vpop.xlane.xlu0 %758
      %v760 = vsub.f32 0.0, %v759
      %761 = vst.msk [vmem:[#allocation6] sm:$0xff] %vm740, %v760
      %v762 = vsel %vm733, %v752, 1.0
      %vm763 = vcmask 138240
      %v764 = vsel %vm763, %v762, 0.0
      %vm765 = vcmask 195584
      %766 = vst.msk [vmem:[#allocation2] sm:$0xff] %vm765, %v764
      %767 = vst.msk [vmem:[#allocation3] sm:$0xff] %vm765, 0.0
      %768 = vst.msk [vmem:[#allocation4] sm:$0xff] %vm740, 0.0
    $region53: #{tpu_custom_call.1} parent=1 // pred_fallthru
      _
    %s769 = smul.u32 0, 256
    %s770 = sshra.s32 %s769, 7
    %s771 = sand.u32 %s769, 127
    %s772 = smul.addr %s770, 4
    %s773 = scalar_lea.vmem [#allocation16], %s772
    %v774 = vld [vmem:[%s773] sm:$0xff]
    %v775 = vld [vmem:[%s773 + $0x8] sm:$0xff]
    %v776 = vld [vmem:[%s773 + $0x10] sm:$0xff]
    %v777 = vld [vmem:[#allocation2] sm:$0xff]
    %v778 = vpack.c.bf16 %v777, %v777
    %v779 = vld [vmem:[#allocation13] sm:$0xff]
    %v783 = vunpack.c.l.b16 %v774
    %v784 = vunpack.c.h.b16 %v774
    %v785 = vunpack.c.l.b16 %v775
    %v786 = vunpack.c.h.b16 %v775
    %v787 = vunpack.c.l.b16 %v776
    %v788 = vunpack.c.h.b16 %v776
    %v789 = vpack.c.b16 %v785, %v783
    %v790 = vpack.c.b16 %v786, %v784
    %v791 = vpack.c.b16 %v787, %v787
    %v792 = vpack.c.b16 %v788, %v788
    %vm795 = vcmask 195584
    %v797 = vsel %vm795, %v778, 0
    %vm799 = vcmask 1043456
    %v801 = vsel %vm799, %v791, 0
    %v804 = vsel %vm799, %v792, 0
    %806 = vmatprep.subr.bf16.mxu0 %v790
    %807 = vmatpush1.bf16.msra.mxu0 %v789
    %808 = vmatprep.subr.bf16.mxu0 %v804
    %809 = vmatpush1.bf16.msra.mxu0 %v801
    %810 = vmatprep.subr.bf16.mxu0 0
    %811 = vmatpush1.bf16.msra.mxu0 0
    %812 = vmatprep.subr.bf16.mxu0 0
    %813 = vmatpush1.bf16.msra.mxu0 0
    %814 = vmatprep.subr.bf16.mxu0 0
    %815 = vmatpush1.bf16.msra.mxu0 0
    %816 = vmatprep.subr.bf16.mxu0 0
    %817 = vmatpush1.bf16.msra.mxu0 0
    %818 = vmatprep.subr.bf16.mxu0 0
    %819 = vmatpush1.bf16.msra.mxu0 0
    %820 = vmatprep.subr.bf16.mxu0 0
    %821 = vmatpush1.bf16.msra.mxu0 0
    %822 = vmatprep.subr.bf16.mxu0 0
    %823 = vmatpush1.bf16.msra.mxu0 0
    %824 = vmatprep.subr.bf16.mxu0 0
    %825 = vmatpush1.bf16.msra.mxu0 0
    %826 = vmatprep.subr.bf16.mxu0 0
    %827 = vmatpush1.bf16.msra.mxu0 0
    %828 = vmatprep.subr.bf16.mxu0 0
    %829 = vmatpush1.bf16.msra.mxu0 0
    %830 = vmatprep.subr.bf16.mxu0 0
    %831 = vmatpush1.bf16.msra.mxu0 0
    %832 = vmatprep.subr.bf16.mxu0 0
    %833 = vmatpush1.bf16.msra.mxu0 0
    %834 = vmatprep.subr.bf16.mxu0 0
    %835 = vmatpush1.bf16.msra.mxu0 0
    %836 = vmatprep.subr.bf16.mxu0 0
    %837 = vmatpush1.bf16.msra.mxu0 0
    %838 = vmatprep.mubr.bf16.mxu0 0
    %839 = vmatmul.mubr.bf16.gmra.mrb[0].mxu0 %v797
    %v840 = vpop.f32.mrb[0].mxu0
    %v841 = vadd.f32 0.0, %v840
    %v842 = vpop.f32.mrb[0].mxu0
    %v843 = vadd.f32 0.0, %v842
    %v844 = vpop.f32.mrb[0].mxu0
    %v845 = vpop.f32.mrb[0].mxu0
    %846 = vdwg.mxu0
    %v847 = vld [vmem:[#allocation4] sm:$0xff]
    %v848 = vmul.f32 %v841, 1.442695
    %v849 = vpow.pop %v848
    %v850 = vmul.f32 %v843, 1.442695
    %v851 = vpow.pop %v850
    %v852 = vadd.f32 %v849, %v851
    %853 = vadd.xlane.f32.xlu0 %v852
    %v854 = vpop.xlane.xlu0 %853
    %v855 = vadd.f32 %v847, %v854
    %vm856 = vcmask 7168
    %857 = vst.msk [vmem:[#allocation4] sm:$0xff] %vm856, %v855
    %v858 = vld [vmem:[#allocation3] sm:$0xff]
    %v860 = vunpack.c.l.b16 %v779
    %v861 = vunpack.c.h.b16 %v779
    %v862 = vpack.c.b16 %v860, %v860
    %v863 = vpack.c.b16 %v861, %v861
    %868 = vmatprep.subr.bf16.mxu0 %v790
    %869 = vmatpush1.bf16.xpose.msra.mxu0 %v789
    %870 = vmatprep.subr.bf16.mxu0 %v792
    %871 = vmatpush1.bf16.xpose.msra.mxu0 %v791
    %872 = vmatprep.subr.bf16.mxu0 0
    %873 = vmatpush1.bf16.xpose.msra.mxu0 0
    %874 = vmatprep.subr.bf16.mxu0 0
    %875 = vmatpush1.bf16.xpose.msra.mxu0 0
    %876 = vmatprep.subr.bf16.mxu0 0
    %877 = vmatpush1.bf16.xpose.msra.mxu0 0
    %878 = vmatprep.subr.bf16.mxu0 0
    %879 = vmatpush1.bf16.xpose.msra.mxu0 0
    %880 = vmatprep.subr.bf16.mxu0 0
    %881 = vmatpush1.bf16.xpose.msra.mxu0 0
    %882 = vmatprep.subr.bf16.mxu0 0
    %883 = vmatpush1.bf16.xpose.msra.mxu0 0
    %884 = vmatprep.subr.bf16.mxu0 0
    %885 = vmatpush1.bf16.xpose.msra.mxu0 0
    %886 = vmatprep.subr.bf16.mxu0 0
    %887 = vmatpush1.bf16.xpose.msra.mxu0 0
    %888 = vmatprep.subr.bf16.mxu0 0
    %889 = vmatpush1.bf16.xpose.msra.mxu0 0
    %890 = vmatprep.subr.bf16.mxu0 0
    %891 = vmatpush1.bf16.xpose.msra.mxu0 0
    %892 = vmatprep.subr.bf16.mxu0 0
    %893 = vmatpush1.bf16.xpose.msra.mxu0 0
    %894 = vmatprep.subr.bf16.mxu0 0
    %895 = vmatpush1.bf16.xpose.msra.mxu0 0
    %896 = vmatprep.subr.bf16.mxu0 0
    %897 = vmatpush1.bf16.xpose.msra.mxu0 0
    %898 = vmatprep.subr.bf16.mxu0 0
    %899 = vmatpush1.bf16.xpose.msra.mxu0 0
    %900 = vmatprep.mubr.bf16.mxu0 %v863
    %901 = vmatmul.mubr.bf16.gmra.mrb[0].mxu0 %v862
    %v902 = vpop.f32.mrb[0].mxu0
    %v903 = vadd.f32 0.0, %v902
    %v904 = vpop.f32.mrb[0].mxu0
    %v905 = vpop.f32.mrb[0].mxu0
    %v906 = vpop.f32.mrb[0].mxu0
    %907 = vdwg.mxu0
    %v908 = vadd.f32 %v858, %v903
    %909 = vst.msk [vmem:[#allocation3] sm:$0xff] %vm795, %v908
    // Predicated region
    $region54: #{tpu_custom_call.1} parent=1 // pred_check
      %p910 = pneg %p92
    $region55: #{tpu_custom_call.1} parent=1 // pred_check_branch
      %912 = sbr.rel (%p910) target = $region57
    $region56: #{tpu_custom_call.1} parent=1 // pred_region
      %v913 = vld [vmem:[#allocation3] sm:$0xff]
      %v914 = vld [vmem:[#allocation2] sm:$0xff]
      %v915 = vmul.f32 %v914, %v913
      %vm916 = vcmask 130048
      %v917 = vsel %vm916, %v915, 0.0
      %918 = vadd.xlane.f32.xlu0 %v917
      %v919 = vpop.xlane.xlu0 %918
      %v920 = vadd.f32 %v919, %v913
      %v921 = vld [vmem:[#allocation4] sm:$0xff]
      %v922 = vmax.f32 %v921, 1e-35
      %v923 = vlog2.pop %v922
      %v924 = vmul.f32 %v923, 0.6931472
      %926 = vrot.lane.b32.xlu0 %v924, 17
      %v927 = vpop.permute.xlu0 %926
      %v929 = vmul.f32 %v913, %v927
      %931 = vrot.lane.b32.xlu0 %v920, 1
      %v932 = vpop.permute.xlu0 %931
      %v934 = vsub.f32 %v929, %v932
      %v935 = vld [vmem:[#allocation5] sm:$0xff]
      %v936 = vld [vmem:[#allocation6] sm:$0xff]
      %938 = vrot.lane.b32.xlu0 %v935, 17
      %v939 = vpop.permute.xlu0 %938
      %v941 = vadd.f32 %v934, %v939
      %v942 = vmul.f32 %v936, 1000.0
      %944 = vrot.lane.b32.xlu0 %v942, 17
      %v945 = vpop.permute.xlu0 %944
      %v947 = vadd.f32 %v941, %v945
      %949 = vrot.lane.b32.xlu0 %v936, 17
      %v950 = vpop.permute.xlu0 %949
      %v952 = vadd.f32 %v947, %v950
      %953 = vst [vmem:[#allocation17] sm:$0xff] 0.0
      %955 = vrot.lane.b32.xlu0 %v952, 111
      %v956 = vpop.permute.xlu0 %955
      %958 = vst.msk [vmem:[#allocation17] sm:$0xff] %vm856, %v956
      %960 = vrot.lane.b32.xlu0 %v934, 112
      %v961 = vpop.permute.xlu0 %960
      %vm963 = vcmask 15368
      %964 = vst.msk [vmem:[#allocation17] sm:$0xff] %vm963, %v961
      %965 = vrot.lane.b32.xlu0 %v935, 2
      %v966 = vpop.permute.xlu0 %965
      %vm968 = vcmask 23568
      %969 = vst.msk [vmem:[#allocation17] sm:$0xff] %vm968, %v966
      %970 = vrot.lane.b32.xlu0 %v936, 3
      %v971 = vpop.permute.xlu0 %970
      %vm973 = vcmask 31768
      %974 = vst.msk [vmem:[#allocation17] sm:$0xff] %vm973, %v971
      %v975 = vld [vmem:[#allocation7] sm:$0xff]
      %977 = vrot.lane.b32.xlu0 %v975, 4
      %v978 = vpop.permute.xlu0 %977
      %vm980 = vcmask 64544
      %981 = vst.msk [vmem:[#allocation17] sm:$0xff] %vm980, %v978
    $region57: #{tpu_custom_call.1} parent=1 // pred_fallthru
      _
    // Predicated region
    $region58: #{tpu_custom_call.1} parent=1 // pred_check
      _
    $region59: #{tpu_custom_call.1} parent=1 // pred_check_branch
      %983 = sbr.rel (0) target = $region61
    $region60: #{tpu_custom_call.1} parent=1 // pred_region
      %s985 = ssub.s32 128, 128
      %986 = vsyncadd [#allocation10], %s985
      %s988 = sshll.u32 [#allocation17], 4
      %s989 = int_to_ptr.vmem [resolvable:$true] %s988
      %991 = dma.vmem_to_hbm [thread:$0]  %s989, 128, %s7, [#allocation10]
    $region61: #{tpu_custom_call.1} parent=1 // pred_fallthru
      _
    // Predicated region
    $region62: #{tpu_custom_call.1} parent=1 // pred_check
      _
    $region63: #{tpu_custom_call.1} parent=1 // pred_check_branch
      %993 = sbr.rel (0) target = $region65
    $region64: #{tpu_custom_call.1} parent=1 // pred_region
      %994 = dma.done [#allocation10], 128
    $region65: #{tpu_custom_call.1} parent=1 // pred_fallthru
      _
    %995 = vsyncpa [#allocation9], 1
    %996 = vsyncpa [#allocation12], 1
    %997 = vsyncpa [#allocation15], 1
    %998 = vsyncpa [#allocation10], 1

</llo_original>
